<compile_context>
chip_gen: v7x
topology: tpu7x:2x2x1
jax: 0.10.0
libtpu: 0.0.40
codegen_flags: <defaults>
</compile_context>

<pallas_src>
import jax
import jax.numpy as jnp
from jax import lax
from jax.experimental import pallas as pl
from jax.experimental.pallas import tpu as pltpu


def _mult_attn_kernel(x_ref, wt_ref, b_ref, o_ref):
    # x_ref : (TS, A, D)     fused block of TS batch elements
    # wt_ref: (D, D)         W pre-transposed in the wrapper (Linear = x @ wt)
    # b_ref : (1, D)         bias
    # o_ref : (TS, A_out, A) A_out = A (include_root) or A-1 (ROOT dropped here)
    ts, a, d = x_ref.shape
    a_out = o_ref.shape[1]
    x = x_ref[...]                                   # (TS, A, D)

    # ---- Linear: one big-M matmul over all fused rows (M = TS*A) ----------
    # NOTE: free view when A is a multiple of the sublane tile (8 for f32,
    # 16 for bf16); otherwise Mosaic materializes a copy (correct, slower).
    x2d = x.reshape(ts * a, d)                       # (TS*A, D)
    x1 = jnp.dot(x2d, wt_ref[...],
                 preferred_element_type=jnp.float32) + b_ref[...]
    x1 = x1.astype(x.dtype).reshape(ts, a, d)        # back to compute dtype

    # ---- scores[t, a, b] = sum_i x1[t, a, i] * x[t, b, i] ------------------
    scores = lax.dot_general(
        x1, x,
        dimension_numbers=(((2,), (2,)), ((0,), (0,))),
        preferred_element_type=jnp.float32)          # (TS, A, A), f32 acc

    # Drop the ROOT row in-kernel (cheap sublane-shifted store) instead of an
    # extra HBM pass in the wrapper.
    o_ref[...] = scores[:, a - a_out:, :].astype(o_ref.dtype)


def _choose_tiling(S, A, D, itemsize, a_out, budget_bytes):
    """Pick (TS, steps) so per-step VMEM fits `budget_bytes` and the grid has
    an even number of steps (>= 2 when S >= 2) for v7x's 2 TensorCores."""
    per_ts = (2 * A * D * itemsize            # x block, double-buffered
              + 2 * a_out * A * itemsize      # out block, double-buffered
              + A * D * 4                     # x1 f32 intermediate
              + 2 * A * A * 4)                # scores f32 intermediate + slack
    fixed = 2 * (D * D + D) * itemsize        # W.T + bias, double-buffered
    ts_cap = max(1, (budget_bytes - fixed) // per_ts)
    if S >= 2:                                # keep work for both TCs (v7x)
        ts_cap = max(1, min(ts_cap, (S + 1) // 2))
    ts = int(min(S, ts_cap))
    steps = -(-S // ts)
    if steps > 1 and steps % 2 == 1:          # even step count for 2-TC v7x
        steps += 1
        ts = -(-S // steps)
    return ts, steps


def multiplicative_attention(x, w, b, include_root=False, batch_tile=None,
                             vmem_budget_bytes=40 * 1024 * 1024,
                             vmem_limit_bytes=64 * 1024 * 1024):
    """x: (S, A, D); w: (D, D) torch Linear weight; b: (D,).

    Returns (S, A, A) if include_root else (S, A-1, A)."""
    S, A, D = x.shape
    a_out = A if include_root else A - 1

    if batch_tile is not None:
        TS = int(batch_tile)
        steps = -(-S // TS)
    else:
        TS, steps = _choose_tiling(S, A, D, x.dtype.itemsize, a_out,
                                   vmem_budget_bytes)
    S_pad = TS * steps

    x_in = x if S_pad == S else jnp.pad(x, ((0, S_pad - S), (0, 0), (0, 0)))
    wt = w.T                                  # transpose once, outside kernel
    b2 = b.reshape(1, D)

    out = pl.pallas_call(
        _mult_attn_kernel,
        out_shape=jax.ShapeDtypeStruct((S_pad, a_out, A), x.dtype),
        grid_spec=pltpu.PrefetchScalarGridSpec(
            num_scalar_prefetch=0,
            grid=(steps,),
            in_specs=[
                pl.BlockSpec((TS, A, D), lambda s: (s, 0, 0)),  # fused x slab
                pl.BlockSpec((D, D), lambda s: (0, 0)),         # W.T, grid-invariant
                pl.BlockSpec((1, D), lambda s: (0, 0)),         # bias, grid-invariant
            ],
            out_specs=pl.BlockSpec((TS, a_out, A), lambda s: (s, 0, 0)),
        ),
        compiler_params=pltpu.CompilerParams(
            dimension_semantics=("parallel",),
            vmem_limit_bytes=vmem_limit_bytes,
        ),
    )(x_in, wt, b2)

    if S_pad != S:
        out = out[:S]                         # drop batch padding only
    return out


def _reference(x, w, b, include_root=False):
    x1 = jnp.einsum('sad,od->sao', x, w) + b  # nn.Linear: x @ W.T + b
    out = jnp.einsum('sai,sbi->sab', x1, x)
    if not include_root:
        out = out[:, 1:, :]
    return out


if __name__ == "__main__":
    key = jax.random.PRNGKey(0)
    k_x, k_w, k_b = jax.random.split(key, 3)

    S, A, D = 8, 8, 32                        # batch, seq, hidden (small demo)
    x = jax.random.normal(k_x, (S, A, D), dtype=jnp.float32)
    # deterministic "Linear(input_dim, input_dim, bias=True)" params
    w = jax.random.normal(k_w, (D, D), dtype=jnp.float32) * (1.0 / jnp.sqrt(D))
    b = jax.random.normal(k_b, (D,), dtype=jnp.float32) * 0.1

    # include_root=False (default module behavior) — ROOT row dropped in-kernel
    out = jax.block_until_ready(multiplicative_attention(x, w, b,
                                                         include_root=False))
    ref = _reference(x, w, b, include_root=False)
    assert out.shape == (S, A - 1, A), out.shape
    assert jnp.allclose(out, ref, atol=1e-4, rtol=1e-4), \
        float(jnp.max(jnp.abs(out - ref)))

    # include_root=True path
    out_r = jax.block_until_ready(
        multiplicative_attention(x, w, b, include_root=True))
    ref_r = _reference(x, w, b, include_root=True)
    assert out_r.shape == (S, A, A), out_r.shape
    assert jnp.allclose(out_r, ref_r, atol=1e-4, rtol=1e-4), \
        float(jnp.max(jnp.abs(out_r - ref_r)))

    # Non-divisible batch (exercises batch padding + even grid rounding)
    S2 = 5
    x2 = jax.random.normal(k_x, (S2, A, D), dtype=jnp.float32)
    out_p = jax.block_until_ready(multiplicative_attention(x2, w, b,
                                                           include_root=False))
    ref_p = _reference(x2, w, b, include_root=False)
    assert out_p.shape == (S2, A - 1, A), out_p.shape
    assert jnp.allclose(out_p, ref_p, atol=1e-4, rtol=1e-4), \
        float(jnp.max(jnp.abs(out_p - ref_p)))

    # bf16 operand path (halved DMA bytes, fast MXU on v6e/v7x) — smoke test
    out_bf = jax.block_until_ready(multiplicative_attention(
        x.astype(jnp.bfloat16), w.astype(jnp.bfloat16), b.astype(jnp.bfloat16),
        include_root=False))
    assert out_bf.shape == (S, A - 1, A), out_bf.shape
    assert bool(jnp.all(jnp.isfinite(out_bf.astype(jnp.float32))))

    print("KERNEL_OK")
</pallas_src>

<mosaic_0001>
module attributes {stable_mosaic.version = 11 : i64} {
  func.func @_mult_attn_kernel(%arg0: i32, %arg1: memref<4x8x32xf32, #tpu.memory_space<vmem>>, %arg2: memref<32x32xf32, #tpu.memory_space<vmem>>, %arg3: memref<1x32xf32, #tpu.memory_space<vmem>>, %arg4: memref<4x7x8xf32, #tpu.memory_space<vmem>>) attributes {dimension_semantics = [#tpu.dimension_semantics<parallel>], iteration_bounds = array<i64: 2>, scalar_prefetch = 0 : i64, scratch_operands = 0 : i64, tpu.core_type = #tpu.core_type<tc>, window_params = [{transform_indices = @transform_0, window_bounds = array<i64: 4, 8, 32>}, {pipeline_mode = #tpu.pipeline_mode<synchronous>, transform_indices = @transform_1, window_bounds = array<i64: 32, 32>}, {pipeline_mode = #tpu.pipeline_mode<synchronous>, transform_indices = @transform_2, window_bounds = array<i64: 1, 32>}, {transform_indices = @transform_3, window_bounds = array<i64: 4, 7, 8>}]} {
    %c0 = arith.constant 0 : index
    %c0_0 = arith.constant 0 : index
    %c0_1 = arith.constant 0 : index
    %0 = vector.load %arg1[%c0, %c0_0, %c0_1] : memref<4x8x32xf32, #tpu.memory_space<vmem>>, vector<4x8x32xf32>
    %1 = vector.shape_cast %0 : vector<4x8x32xf32> to vector<32x32xf32>
    %c0_2 = arith.constant 0 : index
    %c0_3 = arith.constant 0 : index
    %2 = vector.load %arg2[%c0_2, %c0_3] : memref<32x32xf32, #tpu.memory_space<vmem>>, vector<32x32xf32>
    %cst = arith.constant dense<0.000000e+00> : vector<32x32xf32>
    %3 = tpu.matmul %1, %2, %cst {dimension_numbers = #tpu.dot_dimension_numbers<[1], [0], [0], [1], [0, 0, 1, 1], [], []>} : vector<32x32xf32>, vector<32x32xf32>, vector<32x32xf32> -> vector<32x32xf32>
    %c0_4 = arith.constant 0 : index
    %c0_5 = arith.constant 0 : index
    %4 = vector.load %arg3[%c0_4, %c0_5] : memref<1x32xf32, #tpu.memory_space<vmem>>, vector<1x32xf32>
    %5 = vector.broadcast %4 : vector<1x32xf32> to vector<32x32xf32>
    %6 = arith.addf %3, %5 : vector<32x32xf32>
    %7 = vector.shape_cast %6 : vector<32x32xf32> to vector<4x8x32xf32>
    %cst_6 = arith.constant dense<0.000000e+00> : vector<4x8x8xf32>
    %8 = tpu.matmul %7, %0, %cst_6 {dimension_numbers = #tpu.dot_dimension_numbers<[2], [2], [1], [1], [0, 0, 0, 1, 1, 1], [0], [0]>} : vector<4x8x32xf32>, vector<4x8x32xf32>, vector<4x8x8xf32> -> vector<4x8x8xf32>
    %9 = vector.extract_strided_slice %8 {offsets = [0, 1, 0], sizes = [4, 7, 8], strides = [1, 1, 1]} : vector<4x8x8xf32> to vector<4x7x8xf32>
    %c0_7 = arith.constant 0 : index
    %c0_8 = arith.constant 0 : index
    %c0_9 = arith.constant 0 : index
    %10 = vector.load %arg4[%c0_7, %c0_8, %c0_9] : memref<4x7x8xf32, #tpu.memory_space<vmem>>, vector<4x7x8xf32>
    tpu.vector_store %arg4[%c0_7, %c0_8, %c0_9], %9 {strides = array<i32>} : memref<4x7x8xf32, #tpu.memory_space<vmem>>, vector<4x7x8xf32>,
    return
  }
  func.func @transform_0(%arg0: i32) -> (i32, i32, i32) {
    %c0_i32 = arith.constant 0 : i32
    %c0_i32_0 = arith.constant 0 : i32
    %c0_i32_1 = arith.constant 0 : i32
    return %arg0, %c0_i32, %c0_i32_0 : i32, i32, i32
  }
  func.func @transform_1(%arg0: i32) -> (i32, i32) {
    %c0_i32 = arith.constant 0 : i32
    %c0_i32_0 = arith.constant 0 : i32
    %c0_i32_1 = arith.constant 0 : i32
    return %c0_i32, %c0_i32_0 : i32, i32
  }
  func.func @transform_2(%arg0: i32) -> (i32, i32) {
    %c0_i32 = arith.constant 0 : i32
    %c0_i32_0 = arith.constant 0 : i32
    %c0_i32_1 = arith.constant 0 : i32
    return %c0_i32, %c0_i32_0 : i32, i32
  }
  func.func @transform_3(%arg0: i32) -> (i32, i32, i32) {
    %c0_i32 = arith.constant 0 : i32
    %c0_i32_0 = arith.constant 0 : i32
    %c0_i32_1 = arith.constant 0 : i32
    return %arg0, %c0_i32, %c0_i32_0 : i32, i32, i32
  }
}

</mosaic_0001>

<llo_original>
// kernel: tpu_custom_call.1
$region0: #{tpu_custom_call.1}
  #allocation0 [shape = 'u32[]', space=smem, size = 0x4, offset = 0x4, fixed_abs, tag = 'smem constant byte address 0x4 - core index']
  #allocation1 [shape = 'u32[144,128]{1,0:T(1,128)}', space=vmem, size = 0x12000, scoped, tag = 'internal scratch']
  %s0 = inlined_call_operand.hbm [shape: f32[8,8,32], index: 0, kind: input, shape index: {}]
  %s1 = inlined_call_operand.hbm [shape: f32[32,32], index: 1, kind: input, shape index: {}]
  %s2 = inlined_call_operand.hbm [shape: f32[1,32], index: 2, kind: input, shape index: {}]
  %s3 = inlined_call_operand.hbm [shape: f32[8,7,8], index: 3, kind: output, shape index: {}]
  %s4 = sld [smem:[#allocation0]]
  $region57: #{tpu_custom_call.1} parent=0
    _
  %s6 = ssub.s32 1, %s4
  %s7 = scalar_select 0, %s6, %s4
  $region1: #{tpu_custom_call.1} parent=0
    #allocation2 [shape = 'u8[32768]{0}', space=vmem, size = 0x8000, scoped, tag = 'input window, operand 0']
    #allocation3 [shape = 's32[2]{0}', space=sflag, size = 0x8, scoped, tag = 'scoped memory for tpu_custom_call.1']
    #allocation4 [shape = 's32[2]{0}', space=sflag, size = 0x8, scoped, tag = 'scoped memory for tpu_custom_call.1']
    #allocation5 [shape = 'u8[16384]{0}', space=vmem, size = 0x4000, scoped, tag = 'input window, operand 1, single buffered']
    #allocation6 [shape = 's32[1]{0}', space=sflag, size = 0x4, scoped, tag = 'scoped memory for tpu_custom_call.1']
    #allocation7 [shape = 'u8[512]{0}', space=vmem, size = 0x400, scoped, tag = 'input window, operand 2, single buffered']
    #allocation8 [shape = 'u8[32768]{0}', space=vmem, size = 0x8000, scoped, tag = 'output window, operand 0']
    %8 = vsyncpa [#allocation3], 0
    %s9 = scalar_lea.sflag [#allocation3], 1
    %10 = vsyncpa %s9, 0
    %11 = vsyncpa [#allocation6], 0
    %12 = vsyncpa [#allocation4], 0
    %s13 = scalar_lea.sflag [#allocation4], 1
    %14 = vsyncpa %s13, 0
    loop: start=0, step=1, limit=4
    $region2: #{tpu_custom_call.1} parent=1 // loop_pre_header
      _
    $region3: #{tpu_custom_call.1} parent=1 // loop_header
      %s16 = sphi 0, %s20
      %p17 = scmp.ge.s32.totalorder %s16, 4
      %s26 = sphi 0, %s28
      %s29 = sphi 0, %s26
      %s30 = sphi 0, %s29
      %s46 = sphi 0, %s30
      %s50 = sphi 0, %s50
      %s52 = sphi 0, %s50
      %s53 = sphi 0, %s52
      %s67 = sphi 0, %s53
      %s71 = sphi 0, %s71
      %s73 = sphi 0, %s71
      %s74 = sphi 0, %s73
      %s88 = sphi 0, %s74
      %s94 = sphi 0, %s96
      %s97 = sphi 0, %s94
      %s98 = sphi 0, %s97
      %s114 = sphi 0, %s98
    $region4: #{tpu_custom_call.1} parent=1 // loop_header_branch
      %19 = sbr.rel (%p17) target = $region8
    $region5: #{tpu_custom_call.1} parent=1 // loop_body
      %s21 = ssub.s32 %s16, 1
      %s22 = ssub.s32 %s16, 2
      %s23 = sadd.s32 %s16, 1
      %s24 = ssub.s32 %s16, %s23
      %p25 = scmp.eq.s32.totalorder %s24, 0
      %s27 = sadd.s32 %s26, 1
      %s28 = scalar_select %p25, %s26, %s27
      %p31 = pneg %p25
      %p32 = scmp.eq.s32.totalorder %s16, 1
      %p33 = por %p31, %p32
      %p34 = scmp.ne.s32.totalorder %s26, %s29
      %p35 = scmp.eq.s32.totalorder %s16, 0
      %p36 = por %p34, %p35
      %p37 = scmp.ne.s32.totalorder %s26, %s29
      %p38 = scmp.eq.s32.totalorder %s21, 1
      %p39 = por %p37, %p38
      %p40 = scmp.ne.s32.totalorder %s29, %s30
      %p41 = scmp.eq.s32.totalorder %s21, 0
      %p42 = por %p40, %p41
      %p43 = scmp.ne.s32.totalorder %s29, %s30
      %p44 = scmp.eq.s32.totalorder %s22, 1
      %p45 = por %p43, %p44
      %p47 = scmp.ne.s32.totalorder %s30, %s46
      %p48 = scmp.eq.s32.totalorder %s22, 0
      %p49 = por %p47, %p48
      %s51 = sadd.s32 %s50, 1
      %p54 = scmp.eq.s32.totalorder %s16, 1
      %p55 = scmp.ne.s32.totalorder %s50, %s52
      %p56 = scmp.eq.s32.totalorder %s16, 0
      %p57 = por %p55, %p56
      %p58 = scmp.ne.s32.totalorder %s50, %s52
      %p59 = scmp.eq.s32.totalorder %s21, 1
      %p60 = por %p58, %p59
      %p61 = scmp.ne.s32.totalorder %s52, %s53
      %p62 = scmp.eq.s32.totalorder %s21, 0
      %p63 = por %p61, %p62
      %p64 = scmp.ne.s32.totalorder %s52, %s53
      %p65 = scmp.eq.s32.totalorder %s22, 1
      %p66 = por %p64, %p65
      %p68 = scmp.ne.s32.totalorder %s53, %s67
      %p69 = scmp.eq.s32.totalorder %s22, 0
      %p70 = por %p68, %p69
      %s72 = sadd.s32 %s71, 1
      %p75 = scmp.eq.s32.totalorder %s16, 1
      %p76 = scmp.ne.s32.totalorder %s71, %s73
      %p77 = scmp.eq.s32.totalorder %s16, 0
      %p78 = por %p76, %p77
      %p79 = scmp.ne.s32.totalorder %s71, %s73
      %p80 = scmp.eq.s32.totalorder %s21, 1
      %p81 = por %p79, %p80
      %p82 = scmp.ne.s32.totalorder %s73, %s74
      %p83 = scmp.eq.s32.totalorder %s21, 0
      %p84 = por %p82, %p83
      %p85 = scmp.ne.s32.totalorder %s73, %s74
      %p86 = scmp.eq.s32.totalorder %s22, 1
      %p87 = por %p85, %p86
      %p89 = scmp.ne.s32.totalorder %s74, %s88
      %p90 = scmp.eq.s32.totalorder %s22, 0
      %p91 = por %p89, %p90
      %s92 = ssub.s32 %s16, %s23
      %p93 = scmp.eq.s32.totalorder %s92, 0
      %s95 = sadd.s32 %s94, 1
      %s96 = scalar_select %p93, %s94, %s95
      %p99 = pneg %p93
      %p100 = scmp.eq.s32.totalorder %s16, 1
      %p101 = por %p99, %p100
      %p102 = scmp.ne.s32.totalorder %s94, %s97
      %p103 = scmp.eq.s32.totalorder %s16, 0
      %p104 = por %p102, %p103
      %p105 = scmp.ne.s32.totalorder %s94, %s97
      %p106 = scmp.eq.s32.totalorder %s21, 1
      %p107 = por %p105, %p106
      %p108 = scmp.ne.s32.totalorder %s97, %s98
      %p109 = scmp.eq.s32.totalorder %s21, 0
      %p110 = por %p108, %p109
      %p111 = scmp.ne.s32.totalorder %s97, %s98
      %p112 = scmp.eq.s32.totalorder %s22, 1
      %p113 = por %p111, %p112
      %p115 = scmp.ne.s32.totalorder %s98, %s114
      %p116 = scmp.eq.s32.totalorder %s22, 0
      %p117 = por %p115, %p116
      %p118 = scmp.le.s32.totalorder 1, %s16
      %p119 = scmp.lt.s32.totalorder %s16, 3
      %p120 = pnand %p118, %p119
      %p121 = pneg %p120
      // Predicated region
      $region9: #{tpu_custom_call.1} parent=5 // pred_check
        _
      $region10: #{tpu_custom_call.1} parent=5 // pred_check_branch
        %123 = sbr.rel (%p120) target = $region12
      $region11: #{tpu_custom_call.1} parent=5 // pred_region
        %s124 = ssub.s32 %s16, 1
        // Predicated region
        $region13: #{tpu_custom_call.1} parent=11 // pred_check
          %p125 = pneg %p63
        $region14: #{tpu_custom_call.1} parent=11 // pred_check_branch
          %127 = sbr.rel (%p125) target = $region16
        $region15: #{tpu_custom_call.1} parent=11 // pred_region
          %s129 = ssub.s32 512, 512
          %130 = vsyncadd [#allocation6], %s129
          %s131 = sshll.u32 [#allocation5], 4
          %s132 = int_to_ptr.vmem [resolvable:$true] %s131
          %137 = dma.hbm_to_vmem [thread:$0]  %s1, 512, %s132, [#allocation6], 128, 128, 8
        $region16: #{tpu_custom_call.1} parent=11 // pred_fallthru
          _
        // Predicated region
        $region17: #{tpu_custom_call.1} parent=11 // pred_check
          %p138 = pneg %p84
        $region18: #{tpu_custom_call.1} parent=11 // pred_check_branch
          %140 = sbr.rel (%p138) target = $region20
        $region19: #{tpu_custom_call.1} parent=11 // pred_region
          %s142 = ssub.s32 16, 16
          %143 = vsyncadd [#allocation6], %s142
          %s145 = sshll.u32 [#allocation7], 4
          %s146 = int_to_ptr.vmem [resolvable:$true] %s145
          %148 = dma.hbm_to_vmem [thread:$0]  %s2, 16, %s146, [#allocation6]
        $region20: #{tpu_custom_call.1} parent=11 // pred_fallthru
          _
      $region12: #{tpu_custom_call.1} parent=5 // pred_fallthru
        _
      %p149 = scmp.lt.s32.totalorder %s16, 2
      // Predicated region
      $region21: #{tpu_custom_call.1} parent=5 // pred_check
        %p150 = pneg %p149
      $region22: #{tpu_custom_call.1} parent=5 // pred_check_branch
        %152 = sbr.rel (%p150) target = $region24
      $region23: #{tpu_custom_call.1} parent=5 // pred_region
        // Predicated region
        $region25: #{tpu_custom_call.1} parent=23 // pred_check
          %p153 = pneg %p36
        $region26: #{tpu_custom_call.1} parent=23 // pred_check_branch
          %155 = sbr.rel (%p153) target = $region28
        $region27: #{tpu_custom_call.1} parent=23 // pred_region
          %s156 = sand.u32 %s26, 1
          %s157 = scalar_lea.sflag [#allocation3], %s156
          %s158 = sand.u32 %s26, 1
          %s159 = smul.addr %s158, 32
          %s160 = scalar_lea.vmem [#allocation2], %s159
          %s161 = smul.u32 4, %s16
          %s163 = ssub.s32 512, 512
          %164 = vsyncadd %s157, %s163
          %s165 = smul.addr %s161, 128
          %s166 = scalar_lea.hbm %s0, %s165
          %s167 = sshll.u32 %s160, 4
          %s168 = int_to_ptr.vmem [resolvable:$true] %s167
          %173 = dma.hbm_to_vmem [thread:$0]  %s166, 512, %s168, %s157, 128, 128, 8
        $region28: #{tpu_custom_call.1} parent=23 // pred_fallthru
          _
      $region24: #{tpu_custom_call.1} parent=5 // pred_fallthru
        _
      %p174 = scmp.le.s32.totalorder 1, %s16
      %p175 = scmp.lt.s32.totalorder %s16, 3
      %p176 = pnand %p174, %p175
      %p177 = pneg %p176
      // Predicated region
      $region29: #{tpu_custom_call.1} parent=5 // pred_check
        _
      $region30: #{tpu_custom_call.1} parent=5 // pred_check_branch
        %179 = sbr.rel (%p176) target = $region32
      $region31: #{tpu_custom_call.1} parent=5 // pred_region
        %s180 = ssub.s32 %s16, 1
        %s181 = sand.u32 %s29, 1
        %s182 = scalar_lea.sflag [#allocation3], %s181
        %s183 = sand.u32 %s29, 1
        %s184 = smul.addr %s183, 32
        %s185 = scalar_lea.vmem [#allocation2], %s184
        // Predicated region
        $region33: #{tpu_custom_call.1} parent=31 // pred_check
          %p186 = pneg %p42
        $region34: #{tpu_custom_call.1} parent=31 // pred_check_branch
          %188 = sbr.rel (%p186) target = $region36
        $region35: #{tpu_custom_call.1} parent=31 // pred_region
          %189 = dma.done %s182, 512
        $region36: #{tpu_custom_call.1} parent=31 // pred_fallthru
          _
        // Predicated region
        $region37: #{tpu_custom_call.1} parent=31 // pred_check
          %p190 = pneg %p63
        $region38: #{tpu_custom_call.1} parent=31 // pred_check_branch
          %192 = sbr.rel (%p190) target = $region40
        $region39: #{tpu_custom_call.1} parent=31 // pred_region
          %193 = dma.done [#allocation6], 512
        $region40: #{tpu_custom_call.1} parent=31 // pred_fallthru
          _
        // Predicated region
        $region41: #{tpu_custom_call.1} parent=31 // pred_check
          %p194 = pneg %p84
        $region42: #{tpu_custom_call.1} parent=31 // pred_check_branch
          %196 = sbr.rel (%p194) target = $region44
        $region43: #{tpu_custom_call.1} parent=31 // pred_region
          %197 = dma.done [#allocation6], 16
        $region44: #{tpu_custom_call.1} parent=31 // pred_fallthru
          _
        %s198 = sand.u32 %s29, 1
        %s199 = scalar_lea.sflag [#allocation3], %s198
        %s200 = sand.u32 %s29, 1
        %s201 = smul.addr %s200, 32
        %s202 = scalar_lea.vmem [#allocation2], %s201
        %p203 = pneg %p42
        %p204 = pneg %p39
        %p205 = pneg %p63
        %p206 = pneg %p60
        %p207 = pneg %p84
        %p208 = pneg %p81
        %p209 = pneg %p110
        %p210 = pneg %p107
        %s211 = sand.u32 %s97, 1
        %s212 = scalar_lea.sflag [#allocation4], %s211
        %s213 = sand.u32 %s97, 1
        %s214 = smul.addr %s213, 32
        %s215 = scalar_lea.vmem [#allocation8], %s214
        %s216 = smul.u32 4, %s21
        %s217 = smul.u32 4, %s21
        %v218 = vld [vmem:[%s185] sm:$0xff]
        %v219 = vld [vmem:[%s185 + $0x8] sm:$0xff]
        %v220 = vld [vmem:[%s185 + $0x10] sm:$0xff]
        %v221 = vld [vmem:[%s185 + $0x18] sm:$0xff]
        %v222 = vld [vmem:[#allocation5] sm:$0xff]
        %v223 = vld [vmem:[#allocation5 + $0x8] sm:$0xff]
        %v224 = vld [vmem:[#allocation5 + $0x10] sm:$0xff]
        %v225 = vld [vmem:[#allocation5 + $0x18] sm:$0xff]
        %v226 = vld [vmem:[#allocation7] sm:$0x1]
        %v228 = vlaneseq
        %v229 = vshrl.u32 %v228, 7
        %v230 = vsub.s32 0, %v229
        %v231 = vrot.slane %v226, %v230
        %vm233 = vcmask 261120
        %v235 = vsel %vm233, %v218, 0
        %v238 = vsel %vm233, %v219, 0
        %v241 = vsel %vm233, %v220, 0
        %v244 = vsel %vm233, %v221, 0
        %246 = vmatprep.subr.mxu0 0.0
        %247 = vmatpush1.msra.mxu0 %v222
        %248 = vmatprep.subr.mxu0 0.0
        %249 = vmatpush1.msra.mxu0 %v223
        %250 = vmatprep.subr.mxu0 0.0
        %251 = vmatpush1.msra.mxu0 %v224
        %252 = vmatprep.subr.mxu0 0.0
        %253 = vmatpush1.msra.mxu0 %v225
        %254 = vmatprep.subr.mxu0 0.0
        %255 = vmatpush1.msra.mxu0 0.0
        %256 = vmatprep.subr.mxu0 0.0
        %257 = vmatpush1.msra.mxu0 0.0
        %258 = vmatprep.subr.mxu0 0.0
        %259 = vmatpush1.msra.mxu0 0.0
        %260 = vmatprep.subr.mxu0 0.0
        %261 = vmatpush1.msra.mxu0 0.0
        %262 = vmatprep.subr.mxu0 0.0
        %263 = vmatpush1.msra.mxu0 0.0
        %264 = vmatprep.subr.mxu0 0.0
        %265 = vmatpush1.msra.mxu0 0.0
        %266 = vmatprep.subr.mxu0 0.0
        %267 = vmatpush1.msra.mxu0 0.0
        %268 = vmatprep.subr.mxu0 0.0
        %269 = vmatpush1.msra.mxu0 0.0
        %270 = vmatprep.subr.mxu0 0.0
        %271 = vmatpush1.msra.mxu0 0.0
        %272 = vmatprep.subr.mxu0 0.0
        %273 = vmatpush1.msra.mxu0 0.0
        %274 = vmatprep.subr.mxu0 0.0
        %275 = vmatpush1.msra.mxu0 0.0
        %276 = vmatprep.subr.mxu0 0.0
        %277 = vmatpush1.msra.mxu0 0.0
        %278 = vmatprep.subr.mxu0 0.0
        %279 = vmatpush1.msra.mxu0 0.0
        %280 = vmatprep.subr.mxu0 0.0
        %281 = vmatpush1.msra.mxu0 0.0
        %282 = vmatprep.subr.mxu0 0.0
        %283 = vmatpush1.msra.mxu0 0.0
        %284 = vmatprep.subr.mxu0 0.0
        %285 = vmatpush1.msra.mxu0 0.0
        %286 = vmatprep.subr.mxu0 0.0
        %287 = vmatpush1.msra.mxu0 0.0
        %288 = vmatprep.subr.mxu0 0.0
        %289 = vmatpush1.msra.mxu0 0.0
        %290 = vmatprep.subr.mxu0 0.0
        %291 = vmatpush1.msra.mxu0 0.0
        %292 = vmatprep.subr.mxu0 0.0
        %293 = vmatpush1.msra.mxu0 0.0
        %294 = vmatprep.subr.mxu0 0.0
        %295 = vmatpush1.msra.mxu0 0.0
        %296 = vmatprep.subr.mxu0 0.0
        %297 = vmatpush1.msra.mxu0 0.0
        %298 = vmatprep.subr.mxu0 0.0
        %299 = vmatpush1.msra.mxu0 0.0
        %300 = vmatprep.subr.mxu0 0.0
        %301 = vmatpush1.msra.mxu0 0.0
        %302 = vmatprep.subr.mxu0 0.0
        %303 = vmatpush1.msra.mxu0 0.0
        %304 = vmatprep.subr.mxu0 0.0
        %305 = vmatpush1.msra.mxu0 0.0
        %306 = vmatprep.subr.mxu0 0.0
        %307 = vmatpush1.msra.mxu0 0.0
        %308 = vmatprep.subr.mxu0 0.0
        %309 = vmatpush1.msra.mxu0 0.0
        %310 = vmatprep.mubr.f32.mxu0 0.0
        %311 = vmatmul.mubr.f32.gmra.mrb[0].mxu0 %v235
        %v312 = vpop.f32.mrb[0].mxu0
        %v313 = vadd.f32 %v231, %v312
        %v314 = vpop.f32.mrb[0].mxu0
        %315 = vmatprep.mubr.f32.mxu0 0.0
        %316 = vmatmul.mubr.f32.gmra.mrb[0].mxu0 %v238
        %v317 = vpop.f32.mrb[0].mxu0
        %v318 = vadd.f32 %v231, %v317
        %v319 = vpop.f32.mrb[0].mxu0
        %320 = vmatprep.mubr.f32.mxu0 0.0
        %321 = vmatmul.mubr.f32.gmra.mrb[0].mxu0 %v241
        %v322 = vpop.f32.mrb[0].mxu0
        %v323 = vadd.f32 %v231, %v322
        %v324 = vpop.f32.mrb[0].mxu0
        %325 = vmatprep.mubr.f32.mxu0 0.0
        %326 = vmatmul.mubr.f32.gmra.mrb[0].mxu0 %v244
        %v327 = vpop.f32.mrb[0].mxu0
        %v328 = vadd.f32 %v231, %v327
        %v329 = vpop.f32.mrb[0].mxu0
        %330 = vdwg.mxu0
        %v332 = vsel %vm233, %v313, 0
        %334 = vmatprep.subr.mxu0 0.0
        %335 = vmatpush1.xpose.msra.mxu0 %v235
        %336 = vmatprep.subr.mxu0 0.0
        %337 = vmatpush1.xpose.msra.mxu0 0.0
        %338 = vmatprep.subr.mxu0 0.0
        %339 = vmatpush1.xpose.msra.mxu0 0.0
        %340 = vmatprep.subr.mxu0 0.0
        %341 = vmatpush1.xpose.msra.mxu0 0.0
        %342 = vmatprep.subr.mxu0 0.0
        %343 = vmatpush1.xpose.msra.mxu0 0.0
        %344 = vmatprep.subr.mxu0 0.0
        %345 = vmatpush1.xpose.msra.mxu0 0.0
        %346 = vmatprep.subr.mxu0 0.0
        %347 = vmatpush1.xpose.msra.mxu0 0.0
        %348 = vmatprep.subr.mxu0 0.0
        %349 = vmatpush1.xpose.msra.mxu0 0.0
        %350 = vmatprep.subr.mxu0 0.0
        %351 = vmatpush1.xpose.msra.mxu0 0.0
        %352 = vmatprep.subr.mxu0 0.0
        %353 = vmatpush1.xpose.msra.mxu0 0.0
        %354 = vmatprep.subr.mxu0 0.0
        %355 = vmatpush1.xpose.msra.mxu0 0.0
        %356 = vmatprep.subr.mxu0 0.0
        %357 = vmatpush1.xpose.msra.mxu0 0.0
        %358 = vmatprep.subr.mxu0 0.0
        %359 = vmatpush1.xpose.msra.mxu0 0.0
        %360 = vmatprep.subr.mxu0 0.0
        %361 = vmatpush1.xpose.msra.mxu0 0.0
        %362 = vmatprep.subr.mxu0 0.0
        %363 = vmatpush1.xpose.msra.mxu0 0.0
        %364 = vmatprep.subr.mxu0 0.0
        %365 = vmatpush1.xpose.msra.mxu0 0.0
        %366 = vmatprep.subr.mxu0 0.0
        %367 = vmatpush1.xpose.msra.mxu0 0.0
        %368 = vmatprep.subr.mxu0 0.0
        %369 = vmatpush1.xpose.msra.mxu0 0.0
        %370 = vmatprep.subr.mxu0 0.0
        %371 = vmatpush1.xpose.msra.mxu0 0.0
        %372 = vmatprep.subr.mxu0 0.0
        %373 = vmatpush1.xpose.msra.mxu0 0.0
        %374 = vmatprep.subr.mxu0 0.0
        %375 = vmatpush1.xpose.msra.mxu0 0.0
        %376 = vmatprep.subr.mxu0 0.0
        %377 = vmatpush1.xpose.msra.mxu0 0.0
        %378 = vmatprep.subr.mxu0 0.0
        %379 = vmatpush1.xpose.msra.mxu0 0.0
        %380 = vmatprep.subr.mxu0 0.0
        %381 = vmatpush1.xpose.msra.mxu0 0.0
        %382 = vmatprep.subr.mxu0 0.0
        %383 = vmatpush1.xpose.msra.mxu0 0.0
        %384 = vmatprep.subr.mxu0 0.0
        %385 = vmatpush1.xpose.msra.mxu0 0.0
        %386 = vmatprep.subr.mxu0 0.0
        %387 = vmatpush1.xpose.msra.mxu0 0.0
        %388 = vmatprep.subr.mxu0 0.0
        %389 = vmatpush1.xpose.msra.mxu0 0.0
        %390 = vmatprep.subr.mxu0 0.0
        %391 = vmatpush1.xpose.msra.mxu0 0.0
        %392 = vmatprep.subr.mxu0 0.0
        %393 = vmatpush1.xpose.msra.mxu0 0.0
        %394 = vmatprep.subr.mxu0 0.0
        %395 = vmatpush1.xpose.msra.mxu0 0.0
        %396 = vmatprep.subr.mxu0 0.0
        %397 = vmatpush1.xpose.msra.mxu0 0.0
        %398 = vmatprep.mubr.f32.mxu0 0.0
        %399 = vmatmul.mubr.f32.gmra.mrb[0].mxu0 %v332
        %v400 = vpop.f32.mrb[0].mxu0
        %v401 = vadd.f32 0.0, %v400
        %v402 = vpop.f32.mrb[0].mxu0
        %403 = vdwg.mxu0
        %v405 = vsel %vm233, %v318, 0
        %407 = vmatprep.subr.mxu0 0.0
        %408 = vmatpush1.xpose.msra.mxu0 %v238
        %409 = vmatprep.subr.mxu0 0.0
        %410 = vmatpush1.xpose.msra.mxu0 0.0
        %411 = vmatprep.subr.mxu0 0.0
        %412 = vmatpush1.xpose.msra.mxu0 0.0
        %413 = vmatprep.subr.mxu0 0.0
        %414 = vmatpush1.xpose.msra.mxu0 0.0
        %415 = vmatprep.subr.mxu0 0.0
        %416 = vmatpush1.xpose.msra.mxu0 0.0
        %417 = vmatprep.subr.mxu0 0.0
        %418 = vmatpush1.xpose.msra.mxu0 0.0
        %419 = vmatprep.subr.mxu0 0.0
        %420 = vmatpush1.xpose.msra.mxu0 0.0
        %421 = vmatprep.subr.mxu0 0.0
        %422 = vmatpush1.xpose.msra.mxu0 0.0
        %423 = vmatprep.subr.mxu0 0.0
        %424 = vmatpush1.xpose.msra.mxu0 0.0
        %425 = vmatprep.subr.mxu0 0.0
        %426 = vmatpush1.xpose.msra.mxu0 0.0
        %427 = vmatprep.subr.mxu0 0.0
        %428 = vmatpush1.xpose.msra.mxu0 0.0
        %429 = vmatprep.subr.mxu0 0.0
        %430 = vmatpush1.xpose.msra.mxu0 0.0
        %431 = vmatprep.subr.mxu0 0.0
        %432 = vmatpush1.xpose.msra.mxu0 0.0
        %433 = vmatprep.subr.mxu0 0.0
        %434 = vmatpush1.xpose.msra.mxu0 0.0
        %435 = vmatprep.subr.mxu0 0.0
        %436 = vmatpush1.xpose.msra.mxu0 0.0
        %437 = vmatprep.subr.mxu0 0.0
        %438 = vmatpush1.xpose.msra.mxu0 0.0
        %439 = vmatprep.subr.mxu0 0.0
        %440 = vmatpush1.xpose.msra.mxu0 0.0
        %441 = vmatprep.subr.mxu0 0.0
        %442 = vmatpush1.xpose.msra.mxu0 0.0
        %443 = vmatprep.subr.mxu0 0.0
        %444 = vmatpush1.xpose.msra.mxu0 0.0
        %445 = vmatprep.subr.mxu0 0.0
        %446 = vmatpush1.xpose.msra.mxu0 0.0
        %447 = vmatprep.subr.mxu0 0.0
        %448 = vmatpush1.xpose.msra.mxu0 0.0
        %449 = vmatprep.subr.mxu0 0.0
        %450 = vmatpush1.xpose.msra.mxu0 0.0
        %451 = vmatprep.subr.mxu0 0.0
        %452 = vmatpush1.xpose.msra.mxu0 0.0
        %453 = vmatprep.subr.mxu0 0.0
        %454 = vmatpush1.xpose.msra.mxu0 0.0
        %455 = vmatprep.subr.mxu0 0.0
        %456 = vmatpush1.xpose.msra.mxu0 0.0
        %457 = vmatprep.subr.mxu0 0.0
        %458 = vmatpush1.xpose.msra.mxu0 0.0
        %459 = vmatprep.subr.mxu0 0.0
        %460 = vmatpush1.xpose.msra.mxu0 0.0
        %461 = vmatprep.subr.mxu0 0.0
        %462 = vmatpush1.xpose.msra.mxu0 0.0
        %463 = vmatprep.subr.mxu0 0.0
        %464 = vmatpush1.xpose.msra.mxu0 0.0
        %465 = vmatprep.subr.mxu0 0.0
        %466 = vmatpush1.xpose.msra.mxu0 0.0
        %467 = vmatprep.subr.mxu0 0.0
        %468 = vmatpush1.xpose.msra.mxu0 0.0
        %469 = vmatprep.subr.mxu0 0.0
        %470 = vmatpush1.xpose.msra.mxu0 0.0
        %471 = vmatprep.mubr.f32.mxu0 0.0
        %472 = vmatmul.mubr.f32.gmra.mrb[0].mxu0 %v405
        %v473 = vpop.f32.mrb[0].mxu0
        %v474 = vadd.f32 0.0, %v473
        %v475 = vpop.f32.mrb[0].mxu0
        %476 = vdwg.mxu0
        %v478 = vsel %vm233, %v323, 0
        %480 = vmatprep.subr.mxu0 0.0
        %481 = vmatpush1.xpose.msra.mxu0 %v241
        %482 = vmatprep.subr.mxu0 0.0
        %483 = vmatpush1.xpose.msra.mxu0 0.0
        %484 = vmatprep.subr.mxu0 0.0
        %485 = vmatpush1.xpose.msra.mxu0 0.0
        %486 = vmatprep.subr.mxu0 0.0
        %487 = vmatpush1.xpose.msra.mxu0 0.0
        %488 = vmatprep.subr.mxu0 0.0
        %489 = vmatpush1.xpose.msra.mxu0 0.0
        %490 = vmatprep.subr.mxu0 0.0
        %491 = vmatpush1.xpose.msra.mxu0 0.0
        %492 = vmatprep.subr.mxu0 0.0
        %493 = vmatpush1.xpose.msra.mxu0 0.0
        %494 = vmatprep.subr.mxu0 0.0
        %495 = vmatpush1.xpose.msra.mxu0 0.0
        %496 = vmatprep.subr.mxu0 0.0
        %497 = vmatpush1.xpose.msra.mxu0 0.0
        %498 = vmatprep.subr.mxu0 0.0
        %499 = vmatpush1.xpose.msra.mxu0 0.0
        %500 = vmatprep.subr.mxu0 0.0
        %501 = vmatpush1.xpose.msra.mxu0 0.0
        %502 = vmatprep.subr.mxu0 0.0
        %503 = vmatpush1.xpose.msra.mxu0 0.0
        %504 = vmatprep.subr.mxu0 0.0
        %505 = vmatpush1.xpose.msra.mxu0 0.0
        %506 = vmatprep.subr.mxu0 0.0
        %507 = vmatpush1.xpose.msra.mxu0 0.0
        %508 = vmatprep.subr.mxu0 0.0
        %509 = vmatpush1.xpose.msra.mxu0 0.0
        %510 = vmatprep.subr.mxu0 0.0
        %511 = vmatpush1.xpose.msra.mxu0 0.0
        %512 = vmatprep.subr.mxu0 0.0
        %513 = vmatpush1.xpose.msra.mxu0 0.0
        %514 = vmatprep.subr.mxu0 0.0
        %515 = vmatpush1.xpose.msra.mxu0 0.0
        %516 = vmatprep.subr.mxu0 0.0
        %517 = vmatpush1.xpose.msra.mxu0 0.0
        %518 = vmatprep.subr.mxu0 0.0
        %519 = vmatpush1.xpose.msra.mxu0 0.0
        %520 = vmatprep.subr.mxu0 0.0
        %521 = vmatpush1.xpose.msra.mxu0 0.0
        %522 = vmatprep.subr.mxu0 0.0
        %523 = vmatpush1.xpose.msra.mxu0 0.0
        %524 = vmatprep.subr.mxu0 0.0
        %525 = vmatpush1.xpose.msra.mxu0 0.0
        %526 = vmatprep.subr.mxu0 0.0
        %527 = vmatpush1.xpose.msra.mxu0 0.0
        %528 = vmatprep.subr.mxu0 0.0
        %529 = vmatpush1.xpose.msra.mxu0 0.0
        %530 = vmatprep.subr.mxu0 0.0
        %531 = vmatpush1.xpose.msra.mxu0 0.0
        %532 = vmatprep.subr.mxu0 0.0
        %533 = vmatpush1.xpose.msra.mxu0 0.0
        %534 = vmatprep.subr.mxu0 0.0
        %535 = vmatpush1.xpose.msra.mxu0 0.0
        %536 = vmatprep.subr.mxu0 0.0
        %537 = vmatpush1.xpose.msra.mxu0 0.0
        %538 = vmatprep.subr.mxu0 0.0
        %539 = vmatpush1.xpose.msra.mxu0 0.0
        %540 = vmatprep.subr.mxu0 0.0
        %541 = vmatpush1.xpose.msra.mxu0 0.0
        %542 = vmatprep.subr.mxu0 0.0
        %543 = vmatpush1.xpose.msra.mxu0 0.0
        %544 = vmatprep.mubr.f32.mxu0 0.0
        %545 = vmatmul.mubr.f32.gmra.mrb[0].mxu0 %v478
        %v546 = vpop.f32.mrb[0].mxu0
        %v547 = vadd.f32 0.0, %v546
        %v548 = vpop.f32.mrb[0].mxu0
        %549 = vdwg.mxu0
        %v551 = vsel %vm233, %v328, 0
        %553 = vmatprep.subr.mxu0 0.0
        %554 = vmatpush1.xpose.msra.mxu0 %v244
        %555 = vmatprep.subr.mxu0 0.0
        %556 = vmatpush1.xpose.msra.mxu0 0.0
        %557 = vmatprep.subr.mxu0 0.0
        %558 = vmatpush1.xpose.msra.mxu0 0.0
        %559 = vmatprep.subr.mxu0 0.0
        %560 = vmatpush1.xpose.msra.mxu0 0.0
        %561 = vmatprep.subr.mxu0 0.0
        %562 = vmatpush1.xpose.msra.mxu0 0.0
        %563 = vmatprep.subr.mxu0 0.0
        %564 = vmatpush1.xpose.msra.mxu0 0.0
        %565 = vmatprep.subr.mxu0 0.0
        %566 = vmatpush1.xpose.msra.mxu0 0.0
        %567 = vmatprep.subr.mxu0 0.0
        %568 = vmatpush1.xpose.msra.mxu0 0.0
        %569 = vmatprep.subr.mxu0 0.0
        %570 = vmatpush1.xpose.msra.mxu0 0.0
        %571 = vmatprep.subr.mxu0 0.0
        %572 = vmatpush1.xpose.msra.mxu0 0.0
        %573 = vmatprep.subr.mxu0 0.0
        %574 = vmatpush1.xpose.msra.mxu0 0.0
        %575 = vmatprep.subr.mxu0 0.0
        %576 = vmatpush1.xpose.msra.mxu0 0.0
        %577 = vmatprep.subr.mxu0 0.0
        %578 = vmatpush1.xpose.msra.mxu0 0.0
        %579 = vmatprep.subr.mxu0 0.0
        %580 = vmatpush1.xpose.msra.mxu0 0.0
        %581 = vmatprep.subr.mxu0 0.0
        %582 = vmatpush1.xpose.msra.mxu0 0.0
        %583 = vmatprep.subr.mxu0 0.0
        %584 = vmatpush1.xpose.msra.mxu0 0.0
        %585 = vmatprep.subr.mxu0 0.0
        %586 = vmatpush1.xpose.msra.mxu0 0.0
        %587 = vmatprep.subr.mxu0 0.0
        %588 = vmatpush1.xpose.msra.mxu0 0.0
        %589 = vmatprep.subr.mxu0 0.0
        %590 = vmatpush1.xpose.msra.mxu0 0.0
        %591 = vmatprep.subr.mxu0 0.0
        %592 = vmatpush1.xpose.msra.mxu0 0.0
        %593 = vmatprep.subr.mxu0 0.0
        %594 = vmatpush1.xpose.msra.mxu0 0.0
        %595 = vmatprep.subr.mxu0 0.0
        %596 = vmatpush1.xpose.msra.mxu0 0.0
        %597 = vmatprep.subr.mxu0 0.0
        %598 = vmatpush1.xpose.msra.mxu0 0.0
        %599 = vmatprep.subr.mxu0 0.0
        %600 = vmatpush1.xpose.msra.mxu0 0.0
        %601 = vmatprep.subr.mxu0 0.0
        %602 = vmatpush1.xpose.msra.mxu0 0.0
        %603 = vmatprep.subr.mxu0 0.0
        %604 = vmatpush1.xpose.msra.mxu0 0.0
        %605 = vmatprep.subr.mxu0 0.0
        %606 = vmatpush1.xpose.msra.mxu0 0.0
        %607 = vmatprep.subr.mxu0 0.0
        %608 = vmatpush1.xpose.msra.mxu0 0.0
        %609 = vmatprep.subr.mxu0 0.0
        %610 = vmatpush1.xpose.msra.mxu0 0.0
        %611 = vmatprep.subr.mxu0 0.0
        %612 = vmatpush1.xpose.msra.mxu0 0.0
        %613 = vmatprep.subr.mxu0 0.0
        %614 = vmatpush1.xpose.msra.mxu0 0.0
        %615 = vmatprep.subr.mxu0 0.0
        %616 = vmatpush1.xpose.msra.mxu0 0.0
        %617 = vmatprep.mubr.f32.mxu0 0.0
        %618 = vmatmul.mubr.f32.gmra.mrb[0].mxu0 %v551
        %v619 = vpop.f32.mrb[0].mxu0
        %v620 = vadd.f32 0.0, %v619
        %v621 = vpop.f32.mrb[0].mxu0
        %622 = vdwg.mxu0
        %vm623 = vcmask 64513
        %624 = vst.msk [vmem:[%s215 - $0x1] sm:$0xfe] %vm623, %v401
        %625 = vst.msk [vmem:[%s215 + $0x7] sm:$0xfe] %vm623, %v474
        %626 = vst.msk [vmem:[%s215 + $0xf] sm:$0xfe] %vm623, %v547
        %627 = vst.msk [vmem:[%s215 + $0x17] sm:$0xfe] %vm623, %v620
        %s628 = sand.u32 %s97, 1
        %s629 = scalar_lea.sflag [#allocation4], %s628
        %s630 = sand.u32 %s97, 1
        %s631 = smul.addr %s630, 32
        %s632 = scalar_lea.vmem [#allocation8], %s631
        // Predicated region
        $region45: #{tpu_custom_call.1} parent=31 // pred_check
          %p633 = pneg %p107
        $region46: #{tpu_custom_call.1} parent=31 // pred_check_branch
          %635 = sbr.rel (%p633) target = $region48
        $region47: #{tpu_custom_call.1} parent=31 // pred_region
          %s636 = smul.u32 4, %s21
          %s638 = ssub.s32 512, 512
          %639 = vsyncadd %s629, %s638
          %s640 = smul.addr %s636, 128
          %s641 = scalar_lea.hbm %s3, %s640
          %s642 = sshll.u32 %s632, 4
          %s643 = int_to_ptr.vmem [resolvable:$true] %s642
          %648 = dma.vmem_to_hbm [thread:$0]  %s643, 512, %s641, %s629, 128, 128, 8
        $region48: #{tpu_custom_call.1} parent=31 // pred_fallthru
          _
      $region32: #{tpu_custom_call.1} parent=5 // pred_fallthru
        _
      %p649 = scmp.le.s32.totalorder 2, %s16
      // Predicated region
      $region49: #{tpu_custom_call.1} parent=5 // pred_check
        %p650 = pneg %p649
      $region50: #{tpu_custom_call.1} parent=5 // pred_check_branch
        %652 = sbr.rel (%p650) target = $region52
      $region51: #{tpu_custom_call.1} parent=5 // pred_region
        %s653 = ssub.s32 %s16, 2
        // Predicated region
        $region53: #{tpu_custom_call.1} parent=51 // pred_check
          %p654 = pneg %p113
        $region54: #{tpu_custom_call.1} parent=51 // pred_check_branch
          %656 = sbr.rel (%p654) target = $region56
        $region55: #{tpu_custom_call.1} parent=51 // pred_region
          %s657 = sand.u32 %s98, 1
          %s658 = scalar_lea.sflag [#allocation4], %s657
          %s659 = sand.u32 %s98, 1
          %s660 = smul.addr %s659, 32
          %s661 = scalar_lea.vmem [#allocation8], %s660
          %662 = dma.done %s658, 512
        $region56: #{tpu_custom_call.1} parent=51 // pred_fallthru
          _
      $region52: #{tpu_custom_call.1} parent=5 // pred_fallthru
        _
    $region6: #{tpu_custom_call.1} parent=1 // loop_footer
      %s20 = sadd.s32 1, %s16
    $region7: #{tpu_custom_call.1} parent=1 // loop_footer_branch
      %15 = sbr.rel target = $region3
    $region8: #{tpu_custom_call.1} parent=1 // loop_exit
      _
    %663 = vsyncpa [#allocation3], 1
    %s664 = scalar_lea.sflag [#allocation3], 1
    %665 = vsyncpa %s664, 1
    %666 = vsyncpa [#allocation6], 1
    %667 = vsyncpa [#allocation4], 1
    %s668 = scalar_lea.sflag [#allocation4], 1
    %669 = vsyncpa %s668, 1

</llo_original>
